<compile_context>
chip_gen: v6e
topology: v6e:2x2x1
jax: 0.10.0
libtpu: 0.0.40
codegen_flags: <defaults>
</compile_context>

<pallas_src>
import functools
import math

import jax
import jax.numpy as jnp
from jax.experimental import pallas as pl
from jax.experimental.pallas import tpu as pltpu


def _round_up(x, m):
    return ((x + m - 1) // m) * m


_D_IN_PAD = 8       # pad K=3 input features to 8 (32 B contiguous row segments in the DMA)
_TM_TARGET = 4096   # row-tile target for large M; padded-VMEM ~8 MiB double-buffered


# ----------------------------- fused Pallas kernel -----------------------------

def _encoder_mlp_kernel(d_in, n_rest, x_ref, w1_ref, b1_ref, *refs):
    """One row-tile of one group (nodes or edges) through the whole MLP.

    Layer 1 (K = d_in = 3) runs as broadcast multiply-adds on the VPU in f32
    (a 3-deep contraction would waste a full MXU pass).  Layers 2..L run on the
    MXU with bf16 operands and f32 accumulation; bias-add / ReLU stay in f32.
    """
    out_ref = refs[-1]
    rest = refs[:-1]                       # n_rest * (w_ref, b_ref)

    x = x_ref[...]                         # (tm, d_in_pad) f32
    w1 = w1_ref[...]                       # (d_in_pad, dl) f32
    b1 = b1_ref[...]                       # (1, dl)        f32

    # First layer on the VPU (exact f32): h = x @ W1 + b1, K = d_in (3).
    h = x[:, 0:1] * w1[0:1, :]
    for k in range(1, d_in):
        h = h + x[:, k:k + 1] * w1[k:k + 1, :]
    h = jnp.maximum(h + b1, 0.0)

    # Remaining layers on the MXU (bf16 operands, f32 accumulation).
    for i in range(n_rest):
        w = rest[2 * i][...]               # (dl, dl) bf16
        b = rest[2 * i + 1][...]           # (1, dl)  f32
        h = jnp.dot(h.astype(jnp.bfloat16), w,
                    preferred_element_type=jnp.float32) + b
        if i < n_rest - 1:
            h = jnp.maximum(h, 0.0)

    out_ref[...] = h.astype(out_ref.dtype)


# ----------------------------- Encoder forward --------------------------------

def encoder_forward(fused, nodes, edges_attributes):
    """
    fused            : pytree from fuse_encoder_params (group-stacked, pre-cast)
    nodes            : (Nb, Np, 3)
    edges_attributes : (Np, Nv, 3)
    returns          : ((Nb, Np, dl), (Np, Nv, dl))
    """
    d_in = nodes.shape[-1]
    d_in_pad = fused["w_first"].shape[1]
    dl = fused["w_first"].shape[-1]
    n_rest = len(fused["w_rest"])

    m_nodes = math.prod(nodes.shape[:-1])
    m_edges = math.prod(edges_attributes.shape[:-1])
    nodes2 = nodes.reshape(m_nodes, d_in)
    edges2 = edges_attributes.reshape(m_edges, d_in)

    # Common padded row count for the two stacked groups (rows -> sublanes).
    m_pad = _round_up(max(m_nodes, m_edges, 8), 8)
    # Row tiling: single tile for small M; for large M distribute rows evenly so
    # tail padding stays < 8 rows per tile.
    n_tiles = max(1, -(-m_pad // _TM_TARGET))
    tm = _round_up(-(-m_pad // n_tiles), 8)
    m_pad = n_tiles * tm

    def pad_group(a, m):
        # Zero-pad rows up to m_pad and features d_in -> d_in_pad.  Padded rows
        # only ever feed row-local MLP math and are sliced off below.
        return jnp.pad(a, ((0, m_pad - m), (0, d_in_pad - d_in)))

    x = jnp.stack([pad_group(nodes2, m_nodes),
                   pad_group(edges2, m_edges)])            # (2, m_pad, d_in_pad) f32

    in_specs = [
        pl.BlockSpec((None, tm, d_in_pad), lambda g, r: (g, r, 0)),   # x row tile
        pl.BlockSpec((None, d_in_pad, dl), lambda g, r: (g, 0, 0)),   # W1 (f32)
        pl.BlockSpec((None, 1, dl), lambda g, r: (g, 0, 0)),          # b1 (f32)
    ]
    flat_rest = []
    for w, b in zip(fused["w_rest"], fused["b_rest"]):
        in_specs.append(pl.BlockSpec((None, dl, dl), lambda g, r: (g, 0, 0)))
        in_specs.append(pl.BlockSpec((None, 1, dl), lambda g, r: (g, 0, 0)))
        flat_rest.extend([w, b])

    out = pl.pallas_call(
        functools.partial(_encoder_mlp_kernel, d_in, n_rest),
        out_shape=jax.ShapeDtypeStruct((2, m_pad, dl), jnp.float32),
        grid_spec=pltpu.PrefetchScalarGridSpec(
            num_scalar_prefetch=0,
            grid=(2, n_tiles),            # (group, row tile); weights re-DMA only on group change
            in_specs=in_specs,
            out_specs=pl.BlockSpec((None, tm, dl), lambda g, r: (g, r, 0)),
        ),
        compiler_params=pltpu.CompilerParams(
            dimension_semantics=("parallel", "parallel"),
            vmem_limit_bytes=32 * 1024 * 1024,
        ),
    )(x, fused["w_first"], fused["b_first"], *flat_rest)

    nodes_enc = out[0, :m_nodes].reshape(*nodes.shape[:-1], dl)
    edges_enc = out[1, :m_edges].reshape(*edges_attributes.shape[:-1], dl)
    return nodes_enc, edges_enc


encoder_forward_jit = jax.jit(encoder_forward)


# ----------------------------- parameter setup -------------------------------

def _xavier_uniform(key, din, dout):
    limit = jnp.sqrt(6.0 / (din + dout))
    return jax.random.uniform(key, (din, dout), jnp.float32, -limit, limit)


def init_mlp(key, dim_in, dim_out, nb_hidden, dim_hidden):
    """Matches torch MLP: first(din->dh), (nb_hidden-1) x (dh->dh), last(dh->dout)."""
    dims = [dim_in] + [dim_hidden] * nb_hidden + [dim_out]
    n_layers = nb_hidden + 1
    keys = jax.random.split(key, n_layers)
    params = []
    for i in range(n_layers):
        w = _xavier_uniform(keys[i], dims[i], dims[i + 1])
        b = jnp.zeros((1, dims[i + 1]), jnp.float32)
        params.append((w, b))
    return params


def init_encoder(key, dim_latent, nb_hidden):
    k_nodes, k_edges = jax.random.split(key, 2)
    return {
        "nodes_encoder": init_mlp(k_nodes, 3, dim_latent, nb_hidden, dim_latent),
        "edges_attributes_encoder": init_mlp(k_edges, 3, dim_latent, nb_hidden, dim_latent),
    }


def fuse_encoder_params(params, d_in_pad=_D_IN_PAD):
    """One-time prep of kernel-ready params: stack the two identical-architecture
    MLPs along a leading group axis, zero-pad W1's input dim to d_in_pad, and
    pre-cast hidden/last weights to bf16 (intentional accuracy trade-off; first
    layer stays exact f32 on the VPU)."""
    nodes = params["nodes_encoder"]
    edges = params["edges_attributes_encoder"]
    assert len(nodes) == len(edges)
    d_in = nodes[0][0].shape[0]
    w_first = jnp.stack([
        jnp.pad(nodes[0][0], ((0, d_in_pad - d_in), (0, 0))),
        jnp.pad(edges[0][0], ((0, d_in_pad - d_in), (0, 0))),
    ])                                                       # (2, d_in_pad, dl) f32
    b_first = jnp.stack([nodes[0][1], edges[0][1]])          # (2, 1, dl) f32
    w_rest = tuple(
        jnp.stack([nodes[i][0], edges[i][0]]).astype(jnp.bfloat16)
        for i in range(1, len(nodes)))                       # each (2, dl, dl) bf16
    b_rest = tuple(
        jnp.stack([nodes[i][1], edges[i][1]])
        for i in range(1, len(nodes)))                       # each (2, 1, dl) f32
    return {"w_first": w_first, "b_first": b_first,
            "w_rest": w_rest, "b_rest": b_rest}


# ---------------------------- pure-JAX reference -------------------------------

def _mlp_reference(x, params):
    h = x
    n = len(params)
    for i, (w, b) in enumerate(params):
        h = h @ w + b[0]
        if i < n - 1:
            h = jnp.maximum(h, 0.0)
    return h


# ----------------------------------- main --------------------------------------

if __name__ == "__main__":
    dim_latent, nb_hidden = 32, 2
    Nb, Np, Nv = 2, 16, 4

    key = jax.random.PRNGKey(0)
    k_param, k_nodes, k_edges = jax.random.split(key, 3)

    params = init_encoder(k_param, dim_latent, nb_hidden)
    fused = fuse_encoder_params(params)          # one-time: stack groups + bf16 pre-cast

    nodes = jax.random.normal(k_nodes, (Nb, Np, 3), jnp.float32)
    edges_attributes = jax.random.normal(k_edges, (Np, Nv, 3), jnp.float32)

    nodes_enc, edges_enc = encoder_forward_jit(fused, nodes, edges_attributes)
    jax.block_until_ready((nodes_enc, edges_enc))

    assert nodes_enc.shape == (Nb, Np, dim_latent)
    assert edges_enc.shape == (Np, Nv, dim_latent)

    # Correctness vs pure-JAX f32 reference (tolerance covers bf16 MXU operands).
    nodes_ref = _mlp_reference(nodes, params["nodes_encoder"])
    edges_ref = _mlp_reference(edges_attributes, params["edges_attributes_encoder"])
    assert jnp.allclose(nodes_enc, nodes_ref, atol=5e-2, rtol=5e-2)
    assert jnp.allclose(edges_enc, edges_ref, atol=5e-2, rtol=5e-2)

    print("KERNEL_OK")
</pallas_src>

<mosaic_0001>
module attributes {stable_mosaic.version = 11 : i64} {
  func.func @_encoder_mlp_kernel(%arg0: i32, %arg1: i32, %arg2: memref<1x64x8xf32, #tpu.memory_space<vmem>>, %arg3: memref<1x8x32xf32, #tpu.memory_space<vmem>>, %arg4: memref<1x1x32xf32, #tpu.memory_space<vmem>>, %arg5: memref<1x32x32xbf16, #tpu.memory_space<vmem>>, %arg6: memref<1x1x32xf32, #tpu.memory_space<vmem>>, %arg7: memref<1x32x32xbf16, #tpu.memory_space<vmem>>, %arg8: memref<1x1x32xf32, #tpu.memory_space<vmem>>, %arg9: memref<1x64x32xf32, #tpu.memory_space<vmem>>) attributes {dimension_semantics = [#tpu.dimension_semantics<parallel>, #tpu.dimension_semantics<parallel>], iteration_bounds = array<i64: 2, 1>, scalar_prefetch = 0 : i64, scratch_operands = 0 : i64, tpu.core_type = #tpu.core_type<tc>, window_params = [{transform_indices = @transform_0, window_bounds = array<i64: 1, 64, 8>}, {transform_indices = @transform_1, window_bounds = array<i64: 1, 8, 32>}, {transform_indices = @transform_2, window_bounds = array<i64: 1, 1, 32>}, {transform_indices = @transform_3, window_bounds = array<i64: 1, 32, 32>}, {transform_indices = @transform_4, window_bounds = array<i64: 1, 1, 32>}, {transform_indices = @transform_5, window_bounds = array<i64: 1, 32, 32>}, {transform_indices = @transform_6, window_bounds = array<i64: 1, 1, 32>}, {transform_indices = @transform_7, window_bounds = array<i64: 1, 64, 32>}]} {
    %c0 = arith.constant 0 : index
    %c0_0 = arith.constant 0 : index
    %c0_1 = arith.constant 0 : index
    %0 = vector.load %arg2[%c0, %c0_0, %c0_1] : memref<1x64x8xf32, #tpu.memory_space<vmem>>, vector<1x64x8xf32>
    %1 = vector.shape_cast %0 : vector<1x64x8xf32> to vector<64x8xf32>
    %c0_2 = arith.constant 0 : index
    %c0_3 = arith.constant 0 : index
    %c0_4 = arith.constant 0 : index
    %2 = vector.load %arg3[%c0_2, %c0_3, %c0_4] : memref<1x8x32xf32, #tpu.memory_space<vmem>>, vector<1x8x32xf32>
    %3 = vector.shape_cast %2 : vector<1x8x32xf32> to vector<8x32xf32>
    %c0_5 = arith.constant 0 : index
    %c0_6 = arith.constant 0 : index
    %c0_7 = arith.constant 0 : index
    %4 = vector.load %arg4[%c0_5, %c0_6, %c0_7] : memref<1x1x32xf32, #tpu.memory_space<vmem>>, vector<1x1x32xf32>
    %5 = vector.shape_cast %4 : vector<1x1x32xf32> to vector<1x32xf32>
    %6 = vector.extract_strided_slice %1 {offsets = [0, 0], sizes = [64, 1], strides = [1, 1]} : vector<64x8xf32> to vector<64x1xf32>
    %7 = vector.extract_strided_slice %3 {offsets = [0, 0], sizes = [1, 32], strides = [1, 1]} : vector<8x32xf32> to vector<1x32xf32>
    %8 = vector.broadcast %6 : vector<64x1xf32> to vector<64x32xf32>
    %9 = vector.broadcast %7 : vector<1x32xf32> to vector<64x32xf32>
    %10 = arith.mulf %8, %9 : vector<64x32xf32>
    %11 = vector.extract_strided_slice %1 {offsets = [0, 1], sizes = [64, 1], strides = [1, 1]} : vector<64x8xf32> to vector<64x1xf32>
    %12 = vector.extract_strided_slice %3 {offsets = [1, 0], sizes = [1, 32], strides = [1, 1]} : vector<8x32xf32> to vector<1x32xf32>
    %13 = vector.broadcast %11 : vector<64x1xf32> to vector<64x32xf32>
    %14 = vector.broadcast %12 : vector<1x32xf32> to vector<64x32xf32>
    %15 = arith.mulf %13, %14 : vector<64x32xf32>
    %16 = arith.addf %10, %15 : vector<64x32xf32>
    %17 = vector.extract_strided_slice %1 {offsets = [0, 2], sizes = [64, 1], strides = [1, 1]} : vector<64x8xf32> to vector<64x1xf32>
    %18 = vector.extract_strided_slice %3 {offsets = [2, 0], sizes = [1, 32], strides = [1, 1]} : vector<8x32xf32> to vector<1x32xf32>
    %19 = vector.broadcast %17 : vector<64x1xf32> to vector<64x32xf32>
    %20 = vector.broadcast %18 : vector<1x32xf32> to vector<64x32xf32>
    %21 = arith.mulf %19, %20 : vector<64x32xf32>
    %22 = arith.addf %16, %21 : vector<64x32xf32>
    %23 = vector.broadcast %5 : vector<1x32xf32> to vector<64x32xf32>
    %24 = arith.addf %22, %23 : vector<64x32xf32>
    %cst = arith.constant 0.000000e+00 : f32
    %25 = vector.broadcast %cst : f32 to vector<64x32xf32>
    %26 = arith.maximumf %24, %25 : vector<64x32xf32>
    %c0_8 = arith.constant 0 : index
    %c0_9 = arith.constant 0 : index
    %c0_10 = arith.constant 0 : index
    %27 = vector.load %arg5[%c0_8, %c0_9, %c0_10] : memref<1x32x32xbf16, #tpu.memory_space<vmem>>, vector<1x32x32xbf16>
    %28 = vector.shape_cast %27 : vector<1x32x32xbf16> to vector<32x32xbf16>
    %c0_11 = arith.constant 0 : index
    %c0_12 = arith.constant 0 : index
    %c0_13 = arith.constant 0 : index
    %29 = vector.load %arg6[%c0_11, %c0_12, %c0_13] : memref<1x1x32xf32, #tpu.memory_space<vmem>>, vector<1x1x32xf32>
    %30 = vector.shape_cast %29 : vector<1x1x32xf32> to vector<1x32xf32>
    %31 = arith.truncf %26 : vector<64x32xf32> to vector<64x32xbf16>
    %cst_14 = arith.constant dense<0.000000e+00> : vector<64x32xf32>
    %32 = tpu.matmul %31, %28, %cst_14 {dimension_numbers = #tpu.dot_dimension_numbers<[1], [0], [0], [1], [0, 0, 1, 1], [], []>} : vector<64x32xbf16>, vector<32x32xbf16>, vector<64x32xf32> -> vector<64x32xf32>
    %33 = vector.broadcast %30 : vector<1x32xf32> to vector<64x32xf32>
    %34 = arith.addf %32, %33 : vector<64x32xf32>
    %cst_15 = arith.constant 0.000000e+00 : f32
    %35 = vector.broadcast %cst_15 : f32 to vector<64x32xf32>
    %36 = arith.maximumf %34, %35 : vector<64x32xf32>
    %c0_16 = arith.constant 0 : index
    %c0_17 = arith.constant 0 : index
    %c0_18 = arith.constant 0 : index
    %37 = vector.load %arg7[%c0_16, %c0_17, %c0_18] : memref<1x32x32xbf16, #tpu.memory_space<vmem>>, vector<1x32x32xbf16>
    %38 = vector.shape_cast %37 : vector<1x32x32xbf16> to vector<32x32xbf16>
    %c0_19 = arith.constant 0 : index
    %c0_20 = arith.constant 0 : index
    %c0_21 = arith.constant 0 : index
    %39 = vector.load %arg8[%c0_19, %c0_20, %c0_21] : memref<1x1x32xf32, #tpu.memory_space<vmem>>, vector<1x1x32xf32>
    %40 = vector.shape_cast %39 : vector<1x1x32xf32> to vector<1x32xf32>
    %41 = arith.truncf %36 : vector<64x32xf32> to vector<64x32xbf16>
    %cst_22 = arith.constant dense<0.000000e+00> : vector<64x32xf32>
    %42 = tpu.matmul %41, %38, %cst_22 {dimension_numbers = #tpu.dot_dimension_numbers<[1], [0], [0], [1], [0, 0, 1, 1], [], []>} : vector<64x32xbf16>, vector<32x32xbf16>, vector<64x32xf32> -> vector<64x32xf32>
    %43 = vector.broadcast %40 : vector<1x32xf32> to vector<64x32xf32>
    %44 = arith.addf %42, %43 : vector<64x32xf32>
    %c0_23 = arith.constant 0 : index
    %c0_24 = arith.constant 0 : index
    %c0_25 = arith.constant 0 : index
    %45 = vector.load %arg9[%c0_23, %c0_24, %c0_25] : memref<1x64x32xf32, #tpu.memory_space<vmem>>, vector<1x64x32xf32>
    %46 = vector.shape_cast %45 : vector<1x64x32xf32> to vector<64x32xf32>
    %47 = vector.shape_cast %44 : vector<64x32xf32> to vector<1x64x32xf32>
    tpu.vector_store %arg9[%c0_23, %c0_24, %c0_25], %47 {strides = array<i32>} : memref<1x64x32xf32, #tpu.memory_space<vmem>>, vector<1x64x32xf32>,
    return
  }
  func.func @transform_0(%arg0: i32, %arg1: i32) -> (i32, i32, i32) {
    %c0_i32 = arith.constant 0 : i32
    %c0_i32_0 = arith.constant 0 : i32
    return %arg0, %arg1, %c0_i32 : i32, i32, i32
  }
  func.func @transform_1(%arg0: i32, %arg1: i32) -> (i32, i32, i32) {
    %c0_i32 = arith.constant 0 : i32
    %c0_i32_0 = arith.constant 0 : i32
    %c0_i32_1 = arith.constant 0 : i32
    return %arg0, %c0_i32, %c0_i32_0 : i32, i32, i32
  }
  func.func @transform_2(%arg0: i32, %arg1: i32) -> (i32, i32, i32) {
    %c0_i32 = arith.constant 0 : i32
    %c0_i32_0 = arith.constant 0 : i32
    %c0_i32_1 = arith.constant 0 : i32
    return %arg0, %c0_i32, %c0_i32_0 : i32, i32, i32
  }
  func.func @transform_3(%arg0: i32, %arg1: i32) -> (i32, i32, i32) {
    %c0_i32 = arith.constant 0 : i32
    %c0_i32_0 = arith.constant 0 : i32
    %c0_i32_1 = arith.constant 0 : i32
    return %arg0, %c0_i32, %c0_i32_0 : i32, i32, i32
  }
  func.func @transform_4(%arg0: i32, %arg1: i32) -> (i32, i32, i32) {
    %c0_i32 = arith.constant 0 : i32
    %c0_i32_0 = arith.constant 0 : i32
    %c0_i32_1 = arith.constant 0 : i32
    return %arg0, %c0_i32, %c0_i32_0 : i32, i32, i32
  }
  func.func @transform_5(%arg0: i32, %arg1: i32) -> (i32, i32, i32) {
    %c0_i32 = arith.constant 0 : i32
    %c0_i32_0 = arith.constant 0 : i32
    %c0_i32_1 = arith.constant 0 : i32
    return %arg0, %c0_i32, %c0_i32_0 : i32, i32, i32
  }
  func.func @transform_6(%arg0: i32, %arg1: i32) -> (i32, i32, i32) {
    %c0_i32 = arith.constant 0 : i32
    %c0_i32_0 = arith.constant 0 : i32
    %c0_i32_1 = arith.constant 0 : i32
    return %arg0, %c0_i32, %c0_i32_0 : i32, i32, i32
  }
  func.func @transform_7(%arg0: i32, %arg1: i32) -> (i32, i32, i32) {
    %c0_i32 = arith.constant 0 : i32
    %c0_i32_0 = arith.constant 0 : i32
    return %arg0, %arg1, %c0_i32 : i32, i32, i32
  }
}

</mosaic_0001>

<llo_original>
// kernel: encoder_forward.1
$region0: #{encoder_forward.1}
  #allocation0 [shape = 'u32[]', space=smem, size = 0x4, offset = 0x4, fixed_abs, tag = 'smem constant byte address 0x4 - core index']
  #allocation1 [shape = 'u32[144,128]{1,0:T(1,128)}', space=vmem, size = 0x12000, scoped, tag = 'internal scratch']
  %s0 = inlined_call_operand.vmem [shape: f32[2,64,8], index: 0, kind: input, shape index: {}]
  %s1 = inlined_call_operand.vmem [shape: f32[2,8,32], index: 1, kind: input, shape index: {}]
  %s2 = inlined_call_operand.vmem [shape: f32[2,1,32], index: 2, kind: input, shape index: {}]
  %s3 = inlined_call_operand.vmem [shape: bf16[2,32,32], index: 3, kind: input, shape index: {}]
  %s4 = inlined_call_operand.vmem [shape: f32[2,1,32], index: 4, kind: input, shape index: {}]
  %s5 = inlined_call_operand.vmem [shape: bf16[2,32,32], index: 5, kind: input, shape index: {}]
  %s6 = inlined_call_operand.vmem [shape: f32[2,1,32], index: 6, kind: input, shape index: {}]
  %s7 = inlined_call_operand.vmem [shape: f32[2,64,32], index: 7, kind: output, shape index: {}]
  %s8 = sld [smem:[#allocation0]]
  $region61: #{encoder_forward.1} parent=0
    _
  %s10 = ssub.s32 1, %s8
  %s11 = scalar_select 0, %s10, %s8
  loop: start=0, step=1, limit=4
  $region2: #{encoder_forward.1} parent=0 // loop_pre_header
    _
  $region3: #{encoder_forward.1} parent=0 // loop_header
    %s13 = sphi 0, %s17
    %p14 = scmp.ge.s32.totalorder %s13, 4
    %s20 = sphi 0, %s32
    %s21 = sphi 0, %s28
    %s22 = sphi 0, %s20
    %s23 = sphi 0, %s21
    %s24 = sphi 0, %s22
    %s25 = sphi 0, %s23
    %s37 = sphi 0, %s39
    %s40 = sphi 0, %s37
    %s41 = sphi 0, %s40
    %s57 = sphi 0, %s41
    %s63 = sphi 0, %s65
    %s66 = sphi 0, %s63
    %s67 = sphi 0, %s66
    %s83 = sphi 0, %s67
    %s89 = sphi 0, %s91
    %s92 = sphi 0, %s89
    %s93 = sphi 0, %s92
    %s109 = sphi 0, %s93
    %s115 = sphi 0, %s117
    %s118 = sphi 0, %s115
    %s119 = sphi 0, %s118
    %s135 = sphi 0, %s119
    %s141 = sphi 0, %s143
    %s144 = sphi 0, %s141
    %s145 = sphi 0, %s144
    %s161 = sphi 0, %s145
    %s167 = sphi 0, %s169
    %s170 = sphi 0, %s167
    %s171 = sphi 0, %s170
    %s187 = sphi 0, %s171
    %s193 = sphi 0, %s195
    %s196 = sphi 0, %s193
    %s197 = sphi 0, %s196
    %s213 = sphi 0, %s197
    %s221 = sphi 0, %s223
    %s224 = sphi 0, %s221
    %s225 = sphi 0, %s224
    %s241 = sphi 0, %s225
  $region4: #{encoder_forward.1} parent=0 // loop_header_branch
    %16 = sbr.rel (%p14) target = $region8
  $region5: #{encoder_forward.1} parent=0 // loop_body
    %s18 = ssub.s32 %s13, 1
    %s19 = ssub.s32 %s13, 2
    %s26 = sadd.s32 1, %s21
    %p27 = scmp.ge.s32.totalorder %s26, 1
    %s28 = scalar_select %p27, 0, %s26
    %s29 = sadd.s32 1, %s20
    %s30 = scalar_select %p27, %s29, %s20
    %p31 = scmp.ge.s32.totalorder %s30, 2
    %s32 = scalar_select %p31, 0, %s30
    %s33 = ssub.s32 %s20, %s32
    %s34 = ssub.s32 %s21, %s28
    %s35 = sor.u32 %s33, %s34
    %p36 = scmp.eq.s32.totalorder %s35, 0
    %s38 = sadd.s32 %s37, 1
    %s39 = scalar_select %p36, %s37, %s38
    %p42 = pneg %p36
    %p43 = scmp.eq.s32.totalorder %s13, 1
    %p44 = por %p42, %p43
    %p45 = scmp.ne.s32.totalorder %s37, %s40
    %p46 = scmp.eq.s32.totalorder %s13, 0
    %p47 = por %p45, %p46
    %p48 = scmp.ne.s32.totalorder %s37, %s40
    %p49 = scmp.eq.s32.totalorder %s18, 1
    %p50 = por %p48, %p49
    %p51 = scmp.ne.s32.totalorder %s40, %s41
    %p52 = scmp.eq.s32.totalorder %s18, 0
    %p53 = por %p51, %p52
    %p54 = scmp.ne.s32.totalorder %s40, %s41
    %p55 = scmp.eq.s32.totalorder %s19, 1
    %p56 = por %p54, %p55
    %p58 = scmp.ne.s32.totalorder %s41, %s57
    %p59 = scmp.eq.s32.totalorder %s19, 0
    %p60 = por %p58, %p59
    %s61 = ssub.s32 %s20, %s32
    %p62 = scmp.eq.s32.totalorder %s61, 0
    %s64 = sadd.s32 %s63, 1
    %s65 = scalar_select %p62, %s63, %s64
    %p68 = pneg %p62
    %p69 = scmp.eq.s32.totalorder %s13, 1
    %p70 = por %p68, %p69
    %p71 = scmp.ne.s32.totalorder %s63, %s66
    %p72 = scmp.eq.s32.totalorder %s13, 0
    %p73 = por %p71, %p72
    %p74 = scmp.ne.s32.totalorder %s63, %s66
    %p75 = scmp.eq.s32.totalorder %s18, 1
    %p76 = por %p74, %p75
    %p77 = scmp.ne.s32.totalorder %s66, %s67
    %p78 = scmp.eq.s32.totalorder %s18, 0
    %p79 = por %p77, %p78
    %p80 = scmp.ne.s32.totalorder %s66, %s67
    %p81 = scmp.eq.s32.totalorder %s19, 1
    %p82 = por %p80, %p81
    %p84 = scmp.ne.s32.totalorder %s67, %s83
    %p85 = scmp.eq.s32.totalorder %s19, 0
    %p86 = por %p84, %p85
    %s87 = ssub.s32 %s20, %s32
    %p88 = scmp.eq.s32.totalorder %s87, 0
    %s90 = sadd.s32 %s89, 1
    %s91 = scalar_select %p88, %s89, %s90
    %p94 = pneg %p88
    %p95 = scmp.eq.s32.totalorder %s13, 1
    %p96 = por %p94, %p95
    %p97 = scmp.ne.s32.totalorder %s89, %s92
    %p98 = scmp.eq.s32.totalorder %s13, 0
    %p99 = por %p97, %p98
    %p100 = scmp.ne.s32.totalorder %s89, %s92
    %p101 = scmp.eq.s32.totalorder %s18, 1
    %p102 = por %p100, %p101
    %p103 = scmp.ne.s32.totalorder %s92, %s93
    %p104 = scmp.eq.s32.totalorder %s18, 0
    %p105 = por %p103, %p104
    %p106 = scmp.ne.s32.totalorder %s92, %s93
    %p107 = scmp.eq.s32.totalorder %s19, 1
    %p108 = por %p106, %p107
    %p110 = scmp.ne.s32.totalorder %s93, %s109
    %p111 = scmp.eq.s32.totalorder %s19, 0
    %p112 = por %p110, %p111
    %s113 = ssub.s32 %s20, %s32
    %p114 = scmp.eq.s32.totalorder %s113, 0
    %s116 = sadd.s32 %s115, 1
    %s117 = scalar_select %p114, %s115, %s116
    %p120 = pneg %p114
    %p121 = scmp.eq.s32.totalorder %s13, 1
    %p122 = por %p120, %p121
    %p123 = scmp.ne.s32.totalorder %s115, %s118
    %p124 = scmp.eq.s32.totalorder %s13, 0
    %p125 = por %p123, %p124
    %p126 = scmp.ne.s32.totalorder %s115, %s118
    %p127 = scmp.eq.s32.totalorder %s18, 1
    %p128 = por %p126, %p127
    %p129 = scmp.ne.s32.totalorder %s118, %s119
    %p130 = scmp.eq.s32.totalorder %s18, 0
    %p131 = por %p129, %p130
    %p132 = scmp.ne.s32.totalorder %s118, %s119
    %p133 = scmp.eq.s32.totalorder %s19, 1
    %p134 = por %p132, %p133
    %p136 = scmp.ne.s32.totalorder %s119, %s135
    %p137 = scmp.eq.s32.totalorder %s19, 0
    %p138 = por %p136, %p137
    %s139 = ssub.s32 %s20, %s32
    %p140 = scmp.eq.s32.totalorder %s139, 0
    %s142 = sadd.s32 %s141, 1
    %s143 = scalar_select %p140, %s141, %s142
    %p146 = pneg %p140
    %p147 = scmp.eq.s32.totalorder %s13, 1
    %p148 = por %p146, %p147
    %p149 = scmp.ne.s32.totalorder %s141, %s144
    %p150 = scmp.eq.s32.totalorder %s13, 0
    %p151 = por %p149, %p150
    %p152 = scmp.ne.s32.totalorder %s141, %s144
    %p153 = scmp.eq.s32.totalorder %s18, 1
    %p154 = por %p152, %p153
    %p155 = scmp.ne.s32.totalorder %s144, %s145
    %p156 = scmp.eq.s32.totalorder %s18, 0
    %p157 = por %p155, %p156
    %p158 = scmp.ne.s32.totalorder %s144, %s145
    %p159 = scmp.eq.s32.totalorder %s19, 1
    %p160 = por %p158, %p159
    %p162 = scmp.ne.s32.totalorder %s145, %s161
    %p163 = scmp.eq.s32.totalorder %s19, 0
    %p164 = por %p162, %p163
    %s165 = ssub.s32 %s20, %s32
    %p166 = scmp.eq.s32.totalorder %s165, 0
    %s168 = sadd.s32 %s167, 1
    %s169 = scalar_select %p166, %s167, %s168
    %p172 = pneg %p166
    %p173 = scmp.eq.s32.totalorder %s13, 1
    %p174 = por %p172, %p173
    %p175 = scmp.ne.s32.totalorder %s167, %s170
    %p176 = scmp.eq.s32.totalorder %s13, 0
    %p177 = por %p175, %p176
    %p178 = scmp.ne.s32.totalorder %s167, %s170
    %p179 = scmp.eq.s32.totalorder %s18, 1
    %p180 = por %p178, %p179
    %p181 = scmp.ne.s32.totalorder %s170, %s171
    %p182 = scmp.eq.s32.totalorder %s18, 0
    %p183 = por %p181, %p182
    %p184 = scmp.ne.s32.totalorder %s170, %s171
    %p185 = scmp.eq.s32.totalorder %s19, 1
    %p186 = por %p184, %p185
    %p188 = scmp.ne.s32.totalorder %s171, %s187
    %p189 = scmp.eq.s32.totalorder %s19, 0
    %p190 = por %p188, %p189
    %s191 = ssub.s32 %s20, %s32
    %p192 = scmp.eq.s32.totalorder %s191, 0
    %s194 = sadd.s32 %s193, 1
    %s195 = scalar_select %p192, %s193, %s194
    %p198 = pneg %p192
    %p199 = scmp.eq.s32.totalorder %s13, 1
    %p200 = por %p198, %p199
    %p201 = scmp.ne.s32.totalorder %s193, %s196
    %p202 = scmp.eq.s32.totalorder %s13, 0
    %p203 = por %p201, %p202
    %p204 = scmp.ne.s32.totalorder %s193, %s196
    %p205 = scmp.eq.s32.totalorder %s18, 1
    %p206 = por %p204, %p205
    %p207 = scmp.ne.s32.totalorder %s196, %s197
    %p208 = scmp.eq.s32.totalorder %s18, 0
    %p209 = por %p207, %p208
    %p210 = scmp.ne.s32.totalorder %s196, %s197
    %p211 = scmp.eq.s32.totalorder %s19, 1
    %p212 = por %p210, %p211
    %p214 = scmp.ne.s32.totalorder %s197, %s213
    %p215 = scmp.eq.s32.totalorder %s19, 0
    %p216 = por %p214, %p215
    %s217 = ssub.s32 %s20, %s32
    %s218 = ssub.s32 %s21, %s28
    %s219 = sor.u32 %s217, %s218
    %p220 = scmp.eq.s32.totalorder %s219, 0
    %s222 = sadd.s32 %s221, 1
    %s223 = scalar_select %p220, %s221, %s222
    %p226 = pneg %p220
    %p227 = scmp.eq.s32.totalorder %s13, 1
    %p228 = por %p226, %p227
    %p229 = scmp.ne.s32.totalorder %s221, %s224
    %p230 = scmp.eq.s32.totalorder %s13, 0
    %p231 = por %p229, %p230
    %p232 = scmp.ne.s32.totalorder %s221, %s224
    %p233 = scmp.eq.s32.totalorder %s18, 1
    %p234 = por %p232, %p233
    %p235 = scmp.ne.s32.totalorder %s224, %s225
    %p236 = scmp.eq.s32.totalorder %s18, 0
    %p237 = por %p235, %p236
    %p238 = scmp.ne.s32.totalorder %s224, %s225
    %p239 = scmp.eq.s32.totalorder %s19, 1
    %p240 = por %p238, %p239
    %p242 = scmp.ne.s32.totalorder %s225, %s241
    %p243 = scmp.eq.s32.totalorder %s19, 0
    %p244 = por %p242, %p243
    %p245 = scmp.le.s32.totalorder 1, %s13
    %p246 = scmp.lt.s32.totalorder %s13, 3
    %p247 = pnand %p245, %p246
    %p248 = pneg %p247
    // Predicated region
    $region9: #{encoder_forward.1} parent=5 // pred_check
      _
    $region10: #{encoder_forward.1} parent=5 // pred_check_branch
      %250 = sbr.rel (%p247) target = $region12
    $region11: #{encoder_forward.1} parent=5 // pred_region
      %s251 = ssub.s32 %s13, 1
    $region12: #{encoder_forward.1} parent=5 // pred_fallthru
      _
    %p252 = scmp.lt.s32.totalorder %s13, 2
    // Predicated region
    $region13: #{encoder_forward.1} parent=5 // pred_check
      %p253 = pneg %p252
    $region14: #{encoder_forward.1} parent=5 // pred_check_branch
      %255 = sbr.rel (%p253) target = $region16
    $region15: #{encoder_forward.1} parent=5 // pred_region
      // Predicated region
      $region17: #{encoder_forward.1} parent=15 // pred_check
        %p256 = pneg %p47
      $region18: #{encoder_forward.1} parent=15 // pred_check_branch
        %258 = sbr.rel (%p256) target = $region20
      $region19: #{encoder_forward.1} parent=15 // pred_region
        %s259 = smul.u32 8, %s21
        %p260 = scmp.lt.s32.totalorder %s20, 1
        %s261 = scalar_select %p260, %s20, 1
        %p262 = scmp.lt.s32.totalorder %s259, 7
        %s263 = scalar_select %p262, %s259, 7
        %s264 = smul.addr %s261, 8
        %s265 = sadd.s32 %s263, %s264
        %s266 = smul.addr %s265, 8
        %s267 = scalar_lea.vmem %s0, %s266
        %s268 = smul.u32 8, %s21
      $region20: #{encoder_forward.1} parent=15 // pred_fallthru
        _
      // Predicated region
      $region21: #{encoder_forward.1} parent=15 // pred_check
        %p269 = pneg %p73
      $region22: #{encoder_forward.1} parent=15 // pred_check_branch
        %271 = sbr.rel (%p269) target = $region24
      $region23: #{encoder_forward.1} parent=15 // pred_region
        %p272 = scmp.lt.s32.totalorder %s20, 1
        %s273 = scalar_select %p272, %s20, 1
        %s274 = smul.addr %s273, 8
        %s275 = scalar_lea.vmem %s1, %s274
      $region24: #{encoder_forward.1} parent=15 // pred_fallthru
        _
      // Predicated region
      $region25: #{encoder_forward.1} parent=15 // pred_check
        %p276 = pneg %p99
      $region26: #{encoder_forward.1} parent=15 // pred_check_branch
        %278 = sbr.rel (%p276) target = $region28
      $region27: #{encoder_forward.1} parent=15 // pred_region
        %p279 = scmp.lt.s32.totalorder %s20, 1
        %s280 = scalar_select %p279, %s20, 1
        %s281 = scalar_lea.vmem %s2, %s280
      $region28: #{encoder_forward.1} parent=15 // pred_fallthru
        _
      // Predicated region
      $region29: #{encoder_forward.1} parent=15 // pred_check
        %p282 = pneg %p125
      $region30: #{encoder_forward.1} parent=15 // pred_check_branch
        %284 = sbr.rel (%p282) target = $region32
      $region31: #{encoder_forward.1} parent=15 // pred_region
        %p285 = scmp.lt.s32.totalorder %s20, 1
        %s286 = scalar_select %p285, %s20, 1
        %s287 = smul.addr %s286, 4
        %s288 = smul.addr %s287, 4
        %s289 = scalar_lea.vmem %s3, %s288
      $region32: #{encoder_forward.1} parent=15 // pred_fallthru
        _
      // Predicated region
      $region33: #{encoder_forward.1} parent=15 // pred_check
        %p290 = pneg %p151
      $region34: #{encoder_forward.1} parent=15 // pred_check_branch
        %292 = sbr.rel (%p290) target = $region36
      $region35: #{encoder_forward.1} parent=15 // pred_region
        %p293 = scmp.lt.s32.totalorder %s20, 1
        %s294 = scalar_select %p293, %s20, 1
        %s295 = scalar_lea.vmem %s4, %s294
      $region36: #{encoder_forward.1} parent=15 // pred_fallthru
        _
      // Predicated region
      $region37: #{encoder_forward.1} parent=15 // pred_check
        %p296 = pneg %p177
      $region38: #{encoder_forward.1} parent=15 // pred_check_branch
        %298 = sbr.rel (%p296) target = $region40
      $region39: #{encoder_forward.1} parent=15 // pred_region
        %p299 = scmp.lt.s32.totalorder %s20, 1
        %s300 = scalar_select %p299, %s20, 1
        %s301 = smul.addr %s300, 4
        %s302 = smul.addr %s301, 4
        %s303 = scalar_lea.vmem %s5, %s302
      $region40: #{encoder_forward.1} parent=15 // pred_fallthru
        _
      // Predicated region
      $region41: #{encoder_forward.1} parent=15 // pred_check
        %p304 = pneg %p203
      $region42: #{encoder_forward.1} parent=15 // pred_check_branch
        %306 = sbr.rel (%p304) target = $region44
      $region43: #{encoder_forward.1} parent=15 // pred_region
        %p307 = scmp.lt.s32.totalorder %s20, 1
        %s308 = scalar_select %p307, %s20, 1
        %s309 = scalar_lea.vmem %s6, %s308
      $region44: #{encoder_forward.1} parent=15 // pred_fallthru
        _
    $region16: #{encoder_forward.1} parent=5 // pred_fallthru
      _
    %p310 = scmp.le.s32.totalorder 1, %s13
    %p311 = scmp.lt.s32.totalorder %s13, 3
    %p312 = pnand %p310, %p311
    %p313 = pneg %p312
    // Predicated region
    $region45: #{encoder_forward.1} parent=5 // pred_check
      _
    $region46: #{encoder_forward.1} parent=5 // pred_check_branch
      %315 = sbr.rel (%p312) target = $region48
    $region47: #{encoder_forward.1} parent=5 // pred_region
      %s316 = ssub.s32 %s13, 1
      %s317 = smul.u32 8, %s23
      %p318 = scmp.lt.s32.totalorder %s22, 1
      %s319 = scalar_select %p318, %s22, 1
      %p320 = scmp.lt.s32.totalorder %s317, 7
      %s321 = scalar_select %p320, %s317, 7
      %s322 = smul.addr %s319, 8
      %s323 = sadd.s32 %s321, %s322
      %s324 = smul.addr %s323, 8
      %s325 = scalar_lea.vmem %s0, %s324
      %p326 = pneg %p53
      %p327 = pneg %p50
      %p328 = scmp.lt.s32.totalorder %s22, 1
      %s329 = scalar_select %p328, %s22, 1
      %s330 = smul.addr %s329, 8
      %s331 = scalar_lea.vmem %s1, %s330
      %p332 = pneg %p79
      %p333 = pneg %p76
      %p334 = scmp.lt.s32.totalorder %s22, 1
      %s335 = scalar_select %p334, %s22, 1
      %s336 = scalar_lea.vmem %s2, %s335
      %p337 = pneg %p105
      %p338 = pneg %p102
      %p339 = scmp.lt.s32.totalorder %s22, 1
      %s340 = scalar_select %p339, %s22, 1
      %s341 = smul.addr %s340, 4
      %s342 = smul.addr %s341, 4
      %s343 = scalar_lea.vmem %s3, %s342
      %p344 = pneg %p131
      %p345 = pneg %p128
      %p346 = scmp.lt.s32.totalorder %s22, 1
      %s347 = scalar_select %p346, %s22, 1
      %s348 = scalar_lea.vmem %s4, %s347
      %p349 = pneg %p157
      %p350 = pneg %p154
      %p351 = scmp.lt.s32.totalorder %s22, 1
      %s352 = scalar_select %p351, %s22, 1
      %s353 = smul.addr %s352, 4
      %s354 = smul.addr %s353, 4
      %s355 = scalar_lea.vmem %s5, %s354
      %p356 = pneg %p183
      %p357 = pneg %p180
      %p358 = scmp.lt.s32.totalorder %s22, 1
      %s359 = scalar_select %p358, %s22, 1
      %s360 = scalar_lea.vmem %s6, %s359
      %p361 = pneg %p209
      %p362 = pneg %p206
      %p363 = pneg %p237
      %p364 = pneg %p234
      %s365 = smul.u32 8, %s23
      %p366 = scmp.lt.s32.totalorder %s22, 1
      %s367 = scalar_select %p366, %s22, 1
      %p368 = scmp.lt.s32.totalorder %s365, 7
      %s369 = scalar_select %p368, %s365, 7
      %s370 = smul.addr %s367, 8
      %s371 = sadd.s32 %s369, %s370
      %s372 = smul.addr %s371, 8
      %s373 = scalar_lea.vmem %s7, %s372
      %s374 = smul.u32 8, %s23
      %p375 = scmp.lt.s32.totalorder %s22, 1
      %s376 = scalar_select %p375, %s22, 1
      %p377 = scmp.lt.s32.totalorder %s374, 7
      %s378 = scalar_select %p377, %s374, 7
      %s379 = smul.addr %s376, 8
      %s380 = sadd.s32 %s378, %s379
      %s381 = smul.addr %s380, 8
      %s382 = scalar_lea.vmem %s0, %s381
      %s383 = smul.u32 8, %s23
      %p384 = scmp.lt.s32.totalorder %s22, 1
      %s385 = scalar_select %p384, %s22, 1
      %s386 = smul.addr %s385, 8
      %s387 = scalar_lea.vmem %s1, %s386
      %p388 = scmp.lt.s32.totalorder %s22, 1
      %s389 = scalar_select %p388, %s22, 1
      %s390 = scalar_lea.vmem %s2, %s389
      %p391 = scmp.lt.s32.totalorder %s22, 1
      %s392 = scalar_select %p391, %s22, 1
      %s393 = smul.addr %s392, 4
      %s394 = smul.addr %s393, 4
      %s395 = scalar_lea.vmem %s3, %s394
      %p396 = scmp.lt.s32.totalorder %s22, 1
      %s397 = scalar_select %p396, %s22, 1
      %s398 = scalar_lea.vmem %s4, %s397
      %p399 = scmp.lt.s32.totalorder %s22, 1
      %s400 = scalar_select %p399, %s22, 1
      %s401 = smul.addr %s400, 4
      %s402 = smul.addr %s401, 4
      %s403 = scalar_lea.vmem %s5, %s402
      %p404 = scmp.lt.s32.totalorder %s22, 1
      %s405 = scalar_select %p404, %s22, 1
      %s406 = scalar_lea.vmem %s6, %s405
      %s407 = smul.u32 8, %s23
      %p408 = scmp.lt.s32.totalorder %s22, 1
      %s409 = scalar_select %p408, %s22, 1
      %p410 = scmp.lt.s32.totalorder %s407, 7
      %s411 = scalar_select %p410, %s407, 7
      %s412 = smul.addr %s409, 8
      %s413 = sadd.s32 %s411, %s412
      %s414 = smul.addr %s413, 8
      %s415 = scalar_lea.vmem %s7, %s414
      %s416 = smul.u32 8, %s23
      %v418 = vld [vmem:[%s382] sm:$0xff]
      %v419 = vld [vmem:[%s382 + $0x8] sm:$0xff]
      %v420 = vld [vmem:[%s382 + $0x10] sm:$0xff]
      %v421 = vld [vmem:[%s382 + $0x18] sm:$0xff]
      %v422 = vld [vmem:[%s382 + $0x20] sm:$0xff]
      %v423 = vld [vmem:[%s382 + $0x28] sm:$0xff]
      %v424 = vld [vmem:[%s382 + $0x30] sm:$0xff]
      %v425 = vld [vmem:[%s382 + $0x38] sm:$0xff]
      %v426 = vld [vmem:[%s387] sm:$0xff]
      %v427 = vld [vmem:[%s390] sm:$0x1]
      %429 = vset.pattern.permute.xlu0 0
      %430 = vperm.xlu0 %429, %v418
      %v431 = vpop.permute.xlu0 %430
      %434 = vset.pattern.permute.xlu0 0
      %435 = vperm.xlu0 %434, %v419
      %v436 = vpop.permute.xlu0 %435
      %439 = vset.pattern.permute.xlu0 0
      %440 = vperm.xlu0 %439, %v420
      %v441 = vpop.permute.xlu0 %440
      %444 = vset.pattern.permute.xlu0 0
      %445 = vperm.xlu0 %444, %v421
      %v446 = vpop.permute.xlu0 %445
      %449 = vset.pattern.permute.xlu0 0
      %450 = vperm.xlu0 %449, %v422
      %v451 = vpop.permute.xlu0 %450
      %454 = vset.pattern.permute.xlu0 0
      %455 = vperm.xlu0 %454, %v423
      %v456 = vpop.permute.xlu0 %455
      %459 = vset.pattern.permute.xlu0 0
      %460 = vperm.xlu0 %459, %v424
      %v461 = vpop.permute.xlu0 %460
      %464 = vset.pattern.permute.xlu0 0
      %465 = vperm.xlu0 %464, %v425
      %v466 = vpop.permute.xlu0 %465
      %v468 = vlaneseq
      %v469 = vshrl.u32 %v468, 7
      %v470 = vsub.s32 0, %v469
      %v471 = vrot.slane %v426, %v470
      %v472 = vmul.f32 %v431, %v471
      %v473 = vmul.f32 %v436, %v471
      %v474 = vmul.f32 %v441, %v471
      %v475 = vmul.f32 %v446, %v471
      %v476 = vmul.f32 %v451, %v471
      %v477 = vmul.f32 %v456, %v471
      %v478 = vmul.f32 %v461, %v471
      %v479 = vmul.f32 %v466, %v471
      %480 = vset.pattern.permute.xlu0 1
      %481 = vperm.xlu0 %480, %v418
      %v482 = vpop.permute.xlu0 %481
      %484 = vset.pattern.permute.xlu0 1
      %485 = vperm.xlu0 %484, %v419
      %v486 = vpop.permute.xlu0 %485
      %488 = vset.pattern.permute.xlu0 1
      %489 = vperm.xlu0 %488, %v420
      %v490 = vpop.permute.xlu0 %489
      %492 = vset.pattern.permute.xlu0 1
      %493 = vperm.xlu0 %492, %v421
      %v494 = vpop.permute.xlu0 %493
      %496 = vset.pattern.permute.xlu0 1
      %497 = vperm.xlu0 %496, %v422
      %v498 = vpop.permute.xlu0 %497
      %500 = vset.pattern.permute.xlu0 1
      %501 = vperm.xlu0 %500, %v423
      %v502 = vpop.permute.xlu0 %501
      %504 = vset.pattern.permute.xlu0 1
      %505 = vperm.xlu0 %504, %v424
      %v506 = vpop.permute.xlu0 %505
      %508 = vset.pattern.permute.xlu0 1
      %509 = vperm.xlu0 %508, %v425
      %v510 = vpop.permute.xlu0 %509
      %v512 = vlaneseq
      %v513 = vshrl.u32 %v512, 7
      %v514 = vsub.s32 1, %v513
      %v515 = vrot.slane %v426, %v514
      %v516 = vmul.f32 %v482, %v515
      %v517 = vmul.f32 %v486, %v515
      %v518 = vmul.f32 %v490, %v515
      %v519 = vmul.f32 %v494, %v515
      %v520 = vmul.f32 %v498, %v515
      %v521 = vmul.f32 %v502, %v515
      %v522 = vmul.f32 %v506, %v515
      %v523 = vmul.f32 %v510, %v515
      %v524 = vadd.f32 %v472, %v516
      %v525 = vadd.f32 %v473, %v517
      %v526 = vadd.f32 %v474, %v518
      %v527 = vadd.f32 %v475, %v519
      %v528 = vadd.f32 %v476, %v520
      %v529 = vadd.f32 %v477, %v521
      %v530 = vadd.f32 %v478, %v522
      %v531 = vadd.f32 %v479, %v523
      %532 = vset.pattern.permute.xlu0 2
      %533 = vperm.xlu0 %532, %v418
      %v534 = vpop.permute.xlu0 %533
      %536 = vset.pattern.permute.xlu0 2
      %537 = vperm.xlu0 %536, %v419
      %v538 = vpop.permute.xlu0 %537
      %540 = vset.pattern.permute.xlu0 2
      %541 = vperm.xlu0 %540, %v420
      %v542 = vpop.permute.xlu0 %541
      %544 = vset.pattern.permute.xlu0 2
      %545 = vperm.xlu0 %544, %v421
      %v546 = vpop.permute.xlu0 %545
      %548 = vset.pattern.permute.xlu0 2
      %549 = vperm.xlu0 %548, %v422
      %v550 = vpop.permute.xlu0 %549
      %552 = vset.pattern.permute.xlu0 2
      %553 = vperm.xlu0 %552, %v423
      %v554 = vpop.permute.xlu0 %553
      %556 = vset.pattern.permute.xlu0 2
      %557 = vperm.xlu0 %556, %v424
      %v558 = vpop.permute.xlu0 %557
      %560 = vset.pattern.permute.xlu0 2
      %561 = vperm.xlu0 %560, %v425
      %v562 = vpop.permute.xlu0 %561
      %v564 = vlaneseq
      %v565 = vshrl.u32 %v564, 7
      %v566 = vsub.s32 2, %v565
      %v567 = vrot.slane %v426, %v566
      %v568 = vmul.f32 %v534, %v567
      %v569 = vmul.f32 %v538, %v567
      %v570 = vmul.f32 %v542, %v567
      %v571 = vmul.f32 %v546, %v567
      %v572 = vmul.f32 %v550, %v567
      %v573 = vmul.f32 %v554, %v567
      %v574 = vmul.f32 %v558, %v567
      %v575 = vmul.f32 %v562, %v567
      %v576 = vadd.f32 %v524, %v568
      %v577 = vadd.f32 %v525, %v569
      %v578 = vadd.f32 %v526, %v570
      %v579 = vadd.f32 %v527, %v571
      %v580 = vadd.f32 %v528, %v572
      %v581 = vadd.f32 %v529, %v573
      %v582 = vadd.f32 %v530, %v574
      %v583 = vadd.f32 %v531, %v575
      %v585 = vlaneseq
      %v586 = vshrl.u32 %v585, 7
      %v587 = vsub.s32 0, %v586
      %v588 = vrot.slane %v427, %v587
      %v590 = vadd.f32 %v576, %v588
      %v591 = vadd.f32 %v577, %v588
      %v592 = vadd.f32 %v578, %v588
      %v593 = vadd.f32 %v579, %v588
      %v594 = vadd.f32 %v580, %v588
      %v595 = vadd.f32 %v581, %v588
      %v596 = vadd.f32 %v582, %v588
      %v597 = vadd.f32 %v583, %v588
      %v598 = vmax.f32 %v590, 0.0
      %v599 = vmax.f32 %v591, 0.0
      %v600 = vmax.f32 %v592, 0.0
      %v601 = vmax.f32 %v593, 0.0
      %v602 = vmax.f32 %v594, 0.0
      %v603 = vmax.f32 %v595, 0.0
      %v604 = vmax.f32 %v596, 0.0
      %v605 = vmax.f32 %v597, 0.0
      %v606 = vld [vmem:[%s395] sm:$0xf]
      %v607 = vld [vmem:[%s395 + $0x4] sm:$0xf]
      %v608 = vld [vmem:[%s395 + $0x8] sm:$0xf]
      %v609 = vld [vmem:[%s395 + $0xc] sm:$0xf]
      %v610 = vld [vmem:[%s398] sm:$0x1]
      %v611 = vpack.c.bf16 %v599, %v598
      %v612 = vpack.c.bf16 %v601, %v600
      %v613 = vpack.c.bf16 %v603, %v602
      %v614 = vpack.c.bf16 %v605, %v604
      %v616 = vlaneseq
      %v617 = vshrl.u32 %v616, 7
      %v618 = vsub.s32 0, %v617
      %v619 = vrot.slane %v610, %v618
      %v625 = vunpack.c.l.b16 %v606
      %v626 = vunpack.c.l.b16 %v607
      %v627 = vunpack.c.l.b16 %v608
      %v628 = vunpack.c.l.b16 %v609
      %v629 = vpack.c.b16 %v626, %v625
      %v630 = vpack.c.b16 %v628, %v627
      %vm633 = vcmask 261120
      %v635 = vsel %vm633, %v611, 0
      %v638 = vsel %vm633, %v612, 0
      %v641 = vsel %vm633, %v613, 0
      %v644 = vsel %vm633, %v614, 0
      %646 = vmatprep.subr.bf16.mxu0 0
      %647 = vmatpush1.bf16.msra.mxu0 0
      %648 = vmatprep.subr.bf16.mxu0 0
      %649 = vmatpush1.bf16.msra.mxu0 0
      %650 = vmatprep.subr.bf16.mxu0 0
      %651 = vmatpush1.bf16.msra.mxu0 0
      %652 = vmatprep.subr.bf16.mxu0 0
      %653 = vmatpush1.bf16.msra.mxu0 0
      %654 = vmatprep.subr.bf16.mxu0 0
      %655 = vmatpush1.bf16.msra.mxu0 0
      %656 = vmatprep.subr.bf16.mxu0 0
      %657 = vmatpush1.bf16.msra.mxu0 0
      %658 = vmatprep.subr.bf16.mxu0 0
      %659 = vmatpush1.bf16.msra.mxu0 %v630
      %660 = vmatprep.subr.bf16.mxu0 0
      %661 = vmatpush1.bf16.msra.mxu0 %v629
      %662 = vmatprep.subr.bf16.mxu0 0
      %663 = vmatpush2.bf16.msra.mxu0 0
      %664 = vmatprep.subr.bf16.mxu0 0
      %665 = vmatpush2.bf16.msra.mxu0 0
      %666 = vmatprep.subr.bf16.mxu0 0
      %667 = vmatpush2.bf16.msra.mxu0 0
      %668 = vmatprep.subr.bf16.mxu0 0
      %669 = vmatpush2.bf16.msra.mxu0 0
      %670 = vmatprep.subr.bf16.mxu0 0
      %671 = vmatpush2.bf16.msra.mxu0 0
      %672 = vmatprep.subr.bf16.mxu0 0
      %673 = vmatpush2.bf16.msra.mxu0 0
      %674 = vmatprep.subr.bf16.mxu0 0
      %675 = vmatpush2.bf16.msra.mxu0 0
      %676 = vmatprep.subr.bf16.mxu0 0
      %677 = vmatpush2.bf16.msra.mxu0 0
      %678 = vmatprep.mubr.bf16.mxu0 0
      %679 = vmatmul.mubr.bf16.gmra.mxu0 %v635
      %v680 = vpop.f32.mrf.mxu0
      %v681 = vadd.f32 %v619, %v680
      %v682 = vpop.f32.mrf.mxu0
      %v683 = vpop.f32.mrf.mxu0
      %v684 = vadd.f32 %v619, %v683
      %v685 = vpop.f32.mrf.mxu0
      %686 = vmatprep.mubr.bf16.mxu0 0
      %687 = vmatmul.mubr.bf16.gmra.mxu0 %v638
      %v688 = vpop.f32.mrf.mxu0
      %v689 = vadd.f32 %v619, %v688
      %v690 = vpop.f32.mrf.mxu0
      %v691 = vpop.f32.mrf.mxu0
      %v692 = vadd.f32 %v619, %v691
      %v693 = vpop.f32.mrf.mxu0
      %694 = vmatprep.mubr.bf16.mxu0 0
      %695 = vmatmul.mubr.bf16.gmra.mxu0 %v641
      %v696 = vpop.f32.mrf.mxu0
      %v697 = vadd.f32 %v619, %v696
      %v698 = vpop.f32.mrf.mxu0
      %v699 = vpop.f32.mrf.mxu0
      %v700 = vadd.f32 %v619, %v699
      %v701 = vpop.f32.mrf.mxu0
      %702 = vmatprep.mubr.bf16.mxu0 0
      %703 = vmatmul.mubr.bf16.gmra.mxu0 %v644
      %v704 = vpop.f32.mrf.mxu0
      %v705 = vadd.f32 %v619, %v704
      %v706 = vpop.f32.mrf.mxu0
      %v707 = vpop.f32.mrf.mxu0
      %v708 = vadd.f32 %v619, %v707
      %v709 = vpop.f32.mrf.mxu0
      %710 = vdwg.mxu0
      %v711 = vmax.f32 %v681, 0.0
      %v712 = vmax.f32 %v684, 0.0
      %v713 = vmax.f32 %v689, 0.0
      %v714 = vmax.f32 %v692, 0.0
      %v715 = vmax.f32 %v697, 0.0
      %v716 = vmax.f32 %v700, 0.0
      %v717 = vmax.f32 %v705, 0.0
      %v718 = vmax.f32 %v708, 0.0
      %v719 = vld [vmem:[%s403] sm:$0xf]
      %v720 = vld [vmem:[%s403 + $0x4] sm:$0xf]
      %v721 = vld [vmem:[%s403 + $0x8] sm:$0xf]
      %v722 = vld [vmem:[%s403 + $0xc] sm:$0xf]
      %v723 = vld [vmem:[%s406] sm:$0x1]
      %v724 = vpack.c.bf16 %v712, %v711
      %v725 = vpack.c.bf16 %v714, %v713
      %v726 = vpack.c.bf16 %v716, %v715
      %v727 = vpack.c.bf16 %v718, %v717
      %v729 = vlaneseq
      %v730 = vshrl.u32 %v729, 7
      %v731 = vsub.s32 0, %v730
      %v732 = vrot.slane %v723, %v731
      %v738 = vunpack.c.l.b16 %v719
      %v739 = vunpack.c.l.b16 %v720
      %v740 = vunpack.c.l.b16 %v721
      %v741 = vunpack.c.l.b16 %v722
      %v742 = vpack.c.b16 %v739, %v738
      %v743 = vpack.c.b16 %v741, %v740
      %v747 = vsel %vm633, %v724, 0
      %v750 = vsel %vm633, %v725, 0
      %v753 = vsel %vm633, %v726, 0
      %v756 = vsel %vm633, %v727, 0
      %758 = vmatprep.subr.bf16.mxu0 0
      %759 = vmatpush1.bf16.msra.mxu0 0
      %760 = vmatprep.subr.bf16.mxu0 0
      %761 = vmatpush1.bf16.msra.mxu0 0
      %762 = vmatprep.subr.bf16.mxu0 0
      %763 = vmatpush1.bf16.msra.mxu0 0
      %764 = vmatprep.subr.bf16.mxu0 0
      %765 = vmatpush1.bf16.msra.mxu0 0
      %766 = vmatprep.subr.bf16.mxu0 0
      %767 = vmatpush1.bf16.msra.mxu0 0
      %768 = vmatprep.subr.bf16.mxu0 0
      %769 = vmatpush1.bf16.msra.mxu0 0
      %770 = vmatprep.subr.bf16.mxu0 0
      %771 = vmatpush1.bf16.msra.mxu0 %v743
      %772 = vmatprep.subr.bf16.mxu0 0
      %773 = vmatpush1.bf16.msra.mxu0 %v742
      %774 = vmatprep.subr.bf16.mxu0 0
      %775 = vmatpush2.bf16.msra.mxu0 0
      %776 = vmatprep.subr.bf16.mxu0 0
      %777 = vmatpush2.bf16.msra.mxu0 0
      %778 = vmatprep.subr.bf16.mxu0 0
      %779 = vmatpush2.bf16.msra.mxu0 0
      %780 = vmatprep.subr.bf16.mxu0 0
      %781 = vmatpush2.bf16.msra.mxu0 0
      %782 = vmatprep.subr.bf16.mxu0 0
      %783 = vmatpush2.bf16.msra.mxu0 0
      %784 = vmatprep.subr.bf16.mxu0 0
      %785 = vmatpush2.bf16.msra.mxu0 0
      %786 = vmatprep.subr.bf16.mxu0 0
      %787 = vmatpush2.bf16.msra.mxu0 0
      %788 = vmatprep.subr.bf16.mxu0 0
      %789 = vmatpush2.bf16.msra.mxu0 0
      %790 = vmatprep.mubr.bf16.mxu0 0
      %791 = vmatmul.mubr.bf16.gmra.mxu0 %v747
      %v792 = vpop.f32.mrf.mxu0
      %v793 = vadd.f32 %v732, %v792
      %v794 = vpop.f32.mrf.mxu0
      %v795 = vpop.f32.mrf.mxu0
      %v796 = vadd.f32 %v732, %v795
      %v797 = vpop.f32.mrf.mxu0
      %798 = vmatprep.mubr.bf16.mxu0 0
      %799 = vmatmul.mubr.bf16.gmra.mxu0 %v750
      %v800 = vpop.f32.mrf.mxu0
      %v801 = vadd.f32 %v732, %v800
      %v802 = vpop.f32.mrf.mxu0
      %v803 = vpop.f32.mrf.mxu0
      %v804 = vadd.f32 %v732, %v803
      %v805 = vpop.f32.mrf.mxu0
      %806 = vmatprep.mubr.bf16.mxu0 0
      %807 = vmatmul.mubr.bf16.gmra.mxu0 %v753
      %v808 = vpop.f32.mrf.mxu0
      %v809 = vadd.f32 %v732, %v808
      %v810 = vpop.f32.mrf.mxu0
      %v811 = vpop.f32.mrf.mxu0
      %v812 = vadd.f32 %v732, %v811
      %v813 = vpop.f32.mrf.mxu0
      %814 = vmatprep.mubr.bf16.mxu0 0
      %815 = vmatmul.mubr.bf16.gmra.mxu0 %v756
      %v816 = vpop.f32.mrf.mxu0
      %v817 = vadd.f32 %v732, %v816
      %v818 = vpop.f32.mrf.mxu0
      %v819 = vpop.f32.mrf.mxu0
      %v820 = vadd.f32 %v732, %v819
      %v821 = vpop.f32.mrf.mxu0
      %822 = vdwg.mxu0
      %823 = vst.msk [vmem:[%s415] sm:$0xff] %vm633, %v793
      %824 = vst.msk [vmem:[%s415 + $0x8] sm:$0xff] %vm633, %v796
      %825 = vst.msk [vmem:[%s415 + $0x10] sm:$0xff] %vm633, %v801
      %826 = vst.msk [vmem:[%s415 + $0x18] sm:$0xff] %vm633, %v804
      %827 = vst.msk [vmem:[%s415 + $0x20] sm:$0xff] %vm633, %v809
      %828 = vst.msk [vmem:[%s415 + $0x28] sm:$0xff] %vm633, %v812
      %829 = vst.msk [vmem:[%s415 + $0x30] sm:$0xff] %vm633, %v817
      %830 = vst.msk [vmem:[%s415 + $0x38] sm:$0xff] %vm633, %v820
      %s831 = smul.u32 8, %s23
      %p832 = scmp.lt.s32.totalorder %s22, 1
      %s833 = scalar_select %p832, %s22, 1
      %p834 = scmp.lt.s32.totalorder %s831, 7
      %s835 = scalar_select %p834, %s831, 7
      %s836 = smul.addr %s833, 8
      %s837 = sadd.s32 %s835, %s836
      %s838 = smul.addr %s837, 8
      %s839 = scalar_lea.vmem %s7, %s838
      // Predicated region
      $region49: #{encoder_forward.1} parent=47 // pred_check
        %p840 = pneg %p234
      $region50: #{encoder_forward.1} parent=47 // pred_check_branch
        %842 = sbr.rel (%p840) target = $region52
      $region51: #{encoder_forward.1} parent=47 // pred_region
        %s843 = smul.u32 8, %s23
      $region52: #{encoder_forward.1} parent=47 // pred_fallthru
        _
    $region48: #{encoder_forward.1} parent=5 // pred_fallthru
      _
    %p844 = scmp.le.s32.totalorder 2, %s13
    // Predicated region
    $region53: #{encoder_forward.1} parent=5 // pred_check
      %p845 = pneg %p844
    $region54: #{encoder_forward.1} parent=5 // pred_check_branch
      %847 = sbr.rel (%p845) target = $region56
    $region55: #{encoder_forward.1} parent=5 // pred_region
      %s848 = ssub.s32 %s13, 2
      // Predicated region
      $region57: #{encoder_forward.1} parent=55 // pred_check
        %p849 = pneg %p240
      $region58: #{encoder_forward.1} parent=55 // pred_check_branch
        %851 = sbr.rel (%p849) target = $region60
      $region59: #{encoder_forward.1} parent=55 // pred_region
        %s852 = smul.u32 8, %s25
        %p853 = scmp.lt.s32.totalorder %s24, 1
        %s854 = scalar_select %p853, %s24, 1
        %p855 = scmp.lt.s32.totalorder %s852, 7
        %s856 = scalar_select %p855, %s852, 7
        %s857 = smul.addr %s854, 8
        %s858 = sadd.s32 %s856, %s857
        %s859 = smul.addr %s858, 8
        %s860 = scalar_lea.vmem %s7, %s859
      $region60: #{encoder_forward.1} parent=55 // pred_fallthru
        _
    $region56: #{encoder_forward.1} parent=5 // pred_fallthru
      _
  $region6: #{encoder_forward.1} parent=0 // loop_footer
    %s17 = sadd.s32 1, %s13
  $region7: #{encoder_forward.1} parent=0 // loop_footer_branch
    %12 = sbr.rel target = $region3
  $region8: #{encoder_forward.1} parent=0 // loop_exit
    _

</llo_original>
